<compile_context>
chip_gen: v7x
topology: tpu7x:2x2x1
jax: 0.10.0
libtpu: 0.0.40
codegen_flags: <defaults>
</compile_context>

<pallas_src>
import functools

import jax
import jax.numpy as jnp
from jax.experimental import pallas as pl
from jax.experimental.pallas import tpu as pltpu


def _focal_loss_kernel(logits_ref, targets_ref, alpha_ref, out_ref, *,
                       gamma, total_b, reduction):
    i = pl.program_id(0)

    @pl.when(i == 0)
    def _init():
        out_ref[...] = jnp.zeros_like(out_ref)

    logits = logits_ref[...].astype(jnp.float32)   # [tb, C]  (cast in-kernel)
    targets = targets_ref[...]                     # [tb, 1]  int32
    alpha = alpha_ref[...].astype(jnp.float32)     # [1, C]

    tb, C = logits.shape

    # Boolean target mask; both gathers are masked selects + XLU row sums.
    class_ids = jax.lax.broadcasted_iota(jnp.int32, (tb, C), 1)
    mask = class_ids == targets                    # [tb, C] bool

    # Numerically stable cross entropy: ce = logsumexp(logits) - logits[target]
    m = jnp.max(logits, axis=-1, keepdims=True)                          # [tb,1]
    lse = m + jnp.log(jnp.sum(jnp.exp(logits - m), axis=-1, keepdims=True))
    logit_t = jnp.sum(jnp.where(mask, logits, 0.0), axis=-1, keepdims=True)
    alpha_t = jnp.sum(jnp.where(mask, alpha, 0.0), axis=-1, keepdims=True)
    ce = lse - logit_t                                                   # [tb,1]

    pt = jnp.exp(-ce)
    one_minus_pt = jnp.maximum(1.0 - pt, 0.0)   # pt can round a hair above 1

    if float(gamma) == int(gamma) and int(gamma) >= 0:
        # Integer gamma: repeated VPU multiplies, no EUP exp/log pow.
        w = jnp.ones_like(one_minus_pt)
        for _ in range(int(gamma)):
            w = w * one_minus_pt
    else:
        w = jnp.power(one_minus_pt, gamma)

    focal = alpha_t * w * ce                                             # [tb,1]

    # Mask rows past the real batch size (ragged last tile is padded).
    row_ids = i * tb + jax.lax.broadcasted_iota(jnp.int32, (tb, 1), 0)
    focal = jnp.where(row_ids < total_b, focal, 0.0)

    # Running sum in the resident (1,1) output accumulator.
    out_ref[...] += jnp.sum(focal, axis=0, keepdims=True)

    if reduction == "mean":
        @pl.when(i == pl.num_programs(0) - 1)
        def _finalize():
            out_ref[...] = out_ref[...] / jnp.float32(total_b)


def _choose_tile_b(B, C, itemsize):
    """Largest batch tile that double-buffers comfortably on all generations."""
    if B <= 512:
        return B                      # block == full batch dim (always legal)
    tile = 512                        # multiple of 8 -> legal sublane tiling
    # Keep 2 (double-buffer) x tile x C x itemsize well under the v5e 16 MiB
    # scoped-VMEM default (also fine for v6e/v7x 32 MiB scoped defaults).
    while tile > 8 and 2 * tile * C * itemsize > 8 * 1024 * 1024:
        tile //= 2
    return max(tile, 8)


def focal_loss(logits, targets, alpha=None, gamma=1.0, reduction="mean",
               tile_b=None):
    """logits: [B, C] float (any dtype), targets: [B] int, alpha: [C] float.

    Returns the scalar focal loss ('mean' or 'sum' reduction).
    """
    B, C = logits.shape
    if reduction not in ("mean", "sum"):
        # TODO(synk): reduction='none' (per-sample vector output) not implemented.
        raise NotImplementedError("reduction must be 'mean' or 'sum'")
    if alpha is None:
        alpha = jnp.ones((C,), jnp.float32)   # module's alpha=None path
    targets2d = targets.astype(jnp.int32).reshape(B, 1)
    alpha2d = jnp.asarray(alpha, jnp.float32).reshape(1, C)

    if tile_b is None:
        tile_b = _choose_tile_b(B, C, logits.dtype.itemsize)
    grid = (pl.cdiv(B, tile_b),)

    kernel = functools.partial(_focal_loss_kernel, gamma=float(gamma),
                               total_b=B, reduction=reduction)

    # NOTE: logits are passed in their native dtype (bf16 stays bf16 in HBM);
    # the f32 upcast happens on the VMEM tile inside the kernel.
    out = pl.pallas_call(
        kernel,
        out_shape=jax.ShapeDtypeStruct((1, 1), jnp.float32),
        grid=grid,
        in_specs=[
            pl.BlockSpec((tile_b, C), lambda i: (i, 0)),   # logits tile
            pl.BlockSpec((tile_b, 1), lambda i: (i, 0)),   # targets tile
            pl.BlockSpec((1, C), lambda i: (0, 0)),        # alpha, resident
        ],
        out_specs=pl.BlockSpec((1, 1), lambda i: (0, 0)),  # resident accumulator
        compiler_params=pltpu.CompilerParams(
            dimension_semantics=("arbitrary",)),
    )(logits, targets2d, alpha2d)
    return out[0, 0]


def _focal_loss_ref(logits, targets, alpha, gamma):
    logp = jax.nn.log_softmax(logits.astype(jnp.float32), axis=-1)
    ce = -jnp.take_along_axis(logp, targets[:, None], axis=-1)[:, 0]
    pt = jnp.exp(-ce)
    alpha_t = alpha[targets]
    return jnp.mean(alpha_t * (1.0 - pt) ** gamma * ce)


if __name__ == "__main__":
    key = jax.random.PRNGKey(0)
    gamma = 2.0
    C = 16
    alpha = jnp.linspace(0.5, 1.5, C, dtype=jnp.float32)
    k1, k2, k3, k4 = jax.random.split(key, 4)

    # Case 1: single-tile path (block == full batch).
    B = 8
    logits = jax.random.normal(k1, (B, C), dtype=jnp.float32) * 2.0
    targets = jax.random.randint(k2, (B,), 0, C, dtype=jnp.int32)
    out = jax.block_until_ready(focal_loss(logits, targets, alpha, gamma=gamma))
    ref = _focal_loss_ref(logits, targets, alpha, gamma)
    assert jnp.allclose(out, ref, rtol=1e-5, atol=1e-6), (out, ref)

    # Case 2: multi-tile pipelined path with a ragged last tile (B=20, tile=8).
    B2 = 20
    logits2 = jax.random.normal(k3, (B2, C), dtype=jnp.float32) * 2.0
    targets2 = jax.random.randint(k4, (B2,), 0, C, dtype=jnp.int32)
    out2 = jax.block_until_ready(
        focal_loss(logits2, targets2, alpha, gamma=gamma, tile_b=8))
    ref2 = _focal_loss_ref(logits2, targets2, alpha, gamma)
    assert jnp.allclose(out2, ref2, rtol=1e-5, atol=1e-6), (out2, ref2)

    print("KERNEL_OK")
</pallas_src>

<mosaic_0001>
module attributes {stable_mosaic.version = 11 : i64} {
  func.func @_focal_loss_kernel(%arg0: i32, %arg1: memref<8x16xf32, #tpu.memory_space<vmem>>, %arg2: memref<8x1xi32, #tpu.memory_space<vmem>>, %arg3: memref<1x16xf32, #tpu.memory_space<vmem>>, %arg4: memref<1x1xf32, #tpu.memory_space<vmem>>) attributes {dimension_semantics = [#tpu.dimension_semantics<arbitrary>], iteration_bounds = array<i64: 1>, scalar_prefetch = 0 : i64, scratch_operands = 0 : i64, tpu.core_type = #tpu.core_type<tc>, window_params = [{transform_indices = @transform_0, window_bounds = array<i64: 8, 16>}, {transform_indices = @transform_1, window_bounds = array<i64: 8, 1>}, {pipeline_mode = #tpu.pipeline_mode<synchronous>, transform_indices = @transform_2, window_bounds = array<i64: 1, 16>}, {pipeline_mode = #tpu.pipeline_mode<synchronous>, transform_indices = @transform_3, window_bounds = array<i64: 1, 1>}]} {
    %c0_i32 = arith.constant 0 : i32
    %0 = arith.cmpi eq, %arg0, %c0_i32 : i32
    %1 = arith.extui %0 : i1 to i32
    %c0_i32_0 = arith.constant 0 : i32
    %2 = arith.cmpi ne, %1, %c0_i32_0 : i32
    scf.if %2 {
      %cst_24 = arith.constant 0.000000e+00 : f32
      %57 = vector.broadcast %cst_24 : f32 to vector<1x1xf32>
      %c0_25 = arith.constant 0 : index
      %c0_26 = arith.constant 0 : index
      %58 = vector.load %arg4[%c0_25, %c0_26] : memref<1x1xf32, #tpu.memory_space<vmem>>, vector<1x1xf32>
      tpu.vector_store %arg4[%c0_25, %c0_26], %57 {strides = array<i32>} : memref<1x1xf32, #tpu.memory_space<vmem>>, vector<1x1xf32>,
    } else {
    }
    %c0 = arith.constant 0 : index
    %c0_1 = arith.constant 0 : index
    %3 = vector.load %arg1[%c0, %c0_1] : memref<8x16xf32, #tpu.memory_space<vmem>>, vector<8x16xf32>
    %c0_2 = arith.constant 0 : index
    %c0_3 = arith.constant 0 : index
    %4 = vector.load %arg2[%c0_2, %c0_3] : memref<8x1xi32, #tpu.memory_space<vmem>>, vector<8x1xi32>
    %c0_4 = arith.constant 0 : index
    %c0_5 = arith.constant 0 : index
    %5 = vector.load %arg3[%c0_4, %c0_5] : memref<1x16xf32, #tpu.memory_space<vmem>>, vector<1x16xf32>
    %6 = tpu.iota {dimensions = array<i32: 1>} : vector<8x16xi32>
    %7 = vector.broadcast %4 : vector<8x1xi32> to vector<8x16xi32>
    %8 = arith.cmpi eq, %6, %7 : vector<8x16xi32>
    %cst = arith.constant dense<0xFF800000> : vector<8xf32>
    %9 = vector.multi_reduction <maximumf>, %3, %cst [1] : vector<8x16xf32> to vector<8xf32>
    %10 = vector.shape_cast %9 : vector<8xf32> to vector<8x1xf32>
    %11 = vector.broadcast %10 : vector<8x1xf32> to vector<8x16xf32>
    %12 = arith.subf %3, %11 : vector<8x16xf32>
    %13 = math.exp %12 : vector<8x16xf32>
    %cst_6 = arith.constant dense<0.000000e+00> : vector<8xf32>
    %14 = vector.multi_reduction <add>, %13, %cst_6 [1] : vector<8x16xf32> to vector<8xf32>
    %15 = vector.shape_cast %14 : vector<8xf32> to vector<8x1xf32>
    %16 = math.log %15 : vector<8x1xf32>
    %17 = arith.addf %10, %16 : vector<8x1xf32>
    %cst_7 = arith.constant 0.000000e+00 : f32
    %18 = vector.broadcast %cst_7 : f32 to vector<8x16xf32>
    %19 = arith.select %8, %3, %18 : vector<8x16xi1>, vector<8x16xf32>
    %cst_8 = arith.constant dense<0.000000e+00> : vector<8xf32>
    %20 = vector.multi_reduction <add>, %19, %cst_8 [1] : vector<8x16xf32> to vector<8xf32>
    %21 = vector.shape_cast %20 : vector<8xf32> to vector<8x1xf32>
    %cst_9 = arith.constant 0.000000e+00 : f32
    %22 = vector.shape_cast %5 : vector<1x16xf32> to vector<1x16xf32>
    %23 = vector.broadcast %22 : vector<1x16xf32> to vector<8x16xf32>
    %24 = vector.broadcast %cst_9 : f32 to vector<8x16xf32>
    %25 = arith.select %8, %23, %24 : vector<8x16xi1>, vector<8x16xf32>
    %cst_10 = arith.constant dense<0.000000e+00> : vector<8xf32>
    %26 = vector.multi_reduction <add>, %25, %cst_10 [1] : vector<8x16xf32> to vector<8xf32>
    %27 = vector.shape_cast %26 : vector<8xf32> to vector<8x1xf32>
    %28 = arith.subf %17, %21 : vector<8x1xf32>
    %cst_11 = arith.constant 0.000000e+00 : f32
    %29 = vector.broadcast %cst_11 : f32 to vector<8x1xf32>
    %30 = arith.subf %29, %28 : vector<8x1xf32>
    %31 = math.exp %30 : vector<8x1xf32>
    %cst_12 = arith.constant 1.000000e+00 : f32
    %32 = vector.broadcast %cst_12 : f32 to vector<8x1xf32>
    %33 = arith.subf %32, %31 : vector<8x1xf32>
    %cst_13 = arith.constant 0.000000e+00 : f32
    %34 = vector.broadcast %cst_13 : f32 to vector<8x1xf32>
    %35 = arith.maximumf %33, %34 : vector<8x1xf32>
    %cst_14 = arith.constant 1.000000e+00 : f32
    %36 = vector.broadcast %cst_14 : f32 to vector<8x1xf32>
    %37 = arith.mulf %36, %35 : vector<8x1xf32>
    %38 = arith.mulf %37, %35 : vector<8x1xf32>
    %39 = arith.mulf %27, %38 : vector<8x1xf32>
    %40 = arith.mulf %39, %28 : vector<8x1xf32>
    %c8_i32 = arith.constant 8 : i32
    %41 = arith.muli %arg0, %c8_i32 : i32
    %42 = tpu.iota {dimensions = array<i32: 0>} : vector<8x1xi32>
    %43 = vector.broadcast %41 : i32 to vector<8x1xi32>
    %44 = arith.addi %43, %42 : vector<8x1xi32>
    %c8_i32_15 = arith.constant 8 : i32
    %45 = vector.broadcast %c8_i32_15 : i32 to vector<8x1xi32>
    %46 = arith.cmpi slt, %44, %45 : vector<8x1xi32>
    %cst_16 = arith.constant 0.000000e+00 : f32
    %47 = vector.broadcast %cst_16 : f32 to vector<8x1xf32>
    %48 = arith.select %46, %40, %47 : vector<8x1xi1>, vector<8x1xf32>
    %c0_17 = arith.constant 0 : index
    %c0_18 = arith.constant 0 : index
    %49 = vector.load %arg4[%c0_17, %c0_18] : memref<1x1xf32, #tpu.memory_space<vmem>>, vector<1x1xf32>
    %cst_19 = arith.constant dense<0.000000e+00> : vector<1xf32>
    %50 = vector.multi_reduction <add>, %48, %cst_19 [0] : vector<8x1xf32> to vector<1xf32>
    %51 = vector.shape_cast %50 : vector<1xf32> to vector<1x1xf32>
    %52 = arith.addf %49, %51 : vector<1x1xf32>
    %c0_20 = arith.constant 0 : index
    %c0_21 = arith.constant 0 : index
    %53 = vector.load %arg4[%c0_20, %c0_21] : memref<1x1xf32, #tpu.memory_space<vmem>>, vector<1x1xf32>
    tpu.vector_store %arg4[%c0_20, %c0_21], %52 {strides = array<i32>} : memref<1x1xf32, #tpu.memory_space<vmem>>, vector<1x1xf32>,
    %c0_i32_22 = arith.constant 0 : i32
    %54 = arith.cmpi eq, %arg0, %c0_i32_22 : i32
    %55 = arith.extui %54 : i1 to i32
    %c0_i32_23 = arith.constant 0 : i32
    %56 = arith.cmpi ne, %55, %c0_i32_23 : i32
    scf.if %56 {
      %c0_24 = arith.constant 0 : index
      %c0_25 = arith.constant 0 : index
      %57 = vector.load %arg4[%c0_24, %c0_25] : memref<1x1xf32, #tpu.memory_space<vmem>>, vector<1x1xf32>
      %cst_26 = arith.constant 8.000000e+00 : f32
      %58 = vector.broadcast %cst_26 : f32 to vector<1x1xf32>
      %59 = arith.divf %57, %58 : vector<1x1xf32>
      %c0_27 = arith.constant 0 : index
      %c0_28 = arith.constant 0 : index
      %60 = vector.load %arg4[%c0_27, %c0_28] : memref<1x1xf32, #tpu.memory_space<vmem>>, vector<1x1xf32>
      tpu.vector_store %arg4[%c0_27, %c0_28], %59 {strides = array<i32>} : memref<1x1xf32, #tpu.memory_space<vmem>>, vector<1x1xf32>,
    } else {
    }
    return
  }
  func.func @transform_0(%arg0: i32) -> (i32, i32) {
    %c0_i32 = arith.constant 0 : i32
    %c0_i32_0 = arith.constant 0 : i32
    return %arg0, %c0_i32 : i32, i32
  }
  func.func @transform_1(%arg0: i32) -> (i32, i32) {
    %c0_i32 = arith.constant 0 : i32
    %c0_i32_0 = arith.constant 0 : i32
    return %arg0, %c0_i32 : i32, i32
  }
  func.func @transform_2(%arg0: i32) -> (i32, i32) {
    %c0_i32 = arith.constant 0 : i32
    %c0_i32_0 = arith.constant 0 : i32
    %c0_i32_1 = arith.constant 0 : i32
    return %c0_i32, %c0_i32_0 : i32, i32
  }
  func.func @transform_3(%arg0: i32) -> (i32, i32) {
    %c0_i32 = arith.constant 0 : i32
    %c0_i32_0 = arith.constant 0 : i32
    %c0_i32_1 = arith.constant 0 : i32
    return %c0_i32, %c0_i32_0 : i32, i32
  }
}

</mosaic_0001>

<llo_original>
// kernel: tpu_custom_call.1
$region0: #{tpu_custom_call.1}
  #allocation0 [shape = 'u32[]', space=smem, size = 0x4, offset = 0x4, fixed_abs, tag = 'smem constant byte address 0x4 - core index']
  #allocation1 [shape = 'u32[144,128]{1,0:T(1,128)}', space=vmem, size = 0x12000, scoped, tag = 'internal scratch']
  %s0 = inlined_call_operand.vmem [shape: f32[8,16], index: 0, kind: input, shape index: {}]
  %s1 = inlined_call_operand.vmem [shape: s32[8,1], index: 1, kind: input, shape index: {}]
  %s2 = inlined_call_operand.vmem [shape: f32[1,16], index: 2, kind: input, shape index: {}]
  %s3 = inlined_call_operand.hbm [shape: f32[1,1], index: 3, kind: output, shape index: {}]
  %s4 = sld [smem:[#allocation0]]
  $region30: #{tpu_custom_call.1} parent=0
    _
  %s6 = ssub.s32 1, %s4
  %s7 = scalar_select 0, %s6, %s4
  $region1: #{tpu_custom_call.1} parent=0
    #allocation2 [shape = 'u8[512]{0}', space=vmem, size = 0x400, scoped, tag = 'output window, operand 0, single buffered']
    #allocation3 [shape = 's32[1]{0}', space=sflag, size = 0x4, scoped, tag = 'scoped memory for tpu_custom_call.1']
    %8 = vsyncpa [#allocation3], 0
    // Predicated region
    $region2: #{tpu_custom_call.1} parent=1 // pred_check
      _
    $region3: #{tpu_custom_call.1} parent=1 // pred_check_branch
      %10 = sbr.rel (0) target = $region5
    $region4: #{tpu_custom_call.1} parent=1 // pred_region
      _
    $region5: #{tpu_custom_call.1} parent=1 // pred_fallthru
      _
    // Predicated region
    $region6: #{tpu_custom_call.1} parent=1 // pred_check
      _
    $region7: #{tpu_custom_call.1} parent=1 // pred_check_branch
      %12 = sbr.rel (0) target = $region9
    $region8: #{tpu_custom_call.1} parent=1 // pred_region
      _
    $region9: #{tpu_custom_call.1} parent=1 // pred_fallthru
      _
    // Predicated region
    $region10: #{tpu_custom_call.1} parent=1 // pred_check
      _
    $region11: #{tpu_custom_call.1} parent=1 // pred_check_branch
      %14 = sbr.rel (0) target = $region13
    $region12: #{tpu_custom_call.1} parent=1 // pred_region
      _
    $region13: #{tpu_custom_call.1} parent=1 // pred_fallthru
      _
    %p15 = scmp.eq.s32.totalorder 0, 0
    // Predicated region
    $region14: #{tpu_custom_call.1} parent=1 // pred_check
      %p16 = pneg %p15
    $region15: #{tpu_custom_call.1} parent=1 // pred_check_branch
      %18 = sbr.rel (%p16) target = $region17
    $region16: #{tpu_custom_call.1} parent=1 // pred_region
      %vm19 = vcmask 0
      %20 = vst.msk [vmem:[#allocation2] sm:$0x1] %vm19, 0.0
    $region17: #{tpu_custom_call.1} parent=1 // pred_fallthru
      _
    %v21 = vld [vmem:[%s0] sm:$0xff]
    %v22 = vld [vmem:[%s1] sm:$0xff]
    %v23 = vld [vmem:[%s2] sm:$0x1]
    %v24 = vlaneseq
    %v25 = vand.u32 %v24, 127
    %26 = vset.pattern.permute.xlu0 0
    %27 = vperm.xlu0 %26, %v22
    %v28 = vpop.permute.xlu0 %27
    %vm29 = vcmp.eq.s32.totalorder %v25, %v28
    %vm30 = vcmask 130048
    %v31 = vsel %vm30, %v21, -inf
    %32 = vmax.xlane.f32.xlu0 %v31
    %v33 = vpop.xlane.xlu0 %32
    %v34 = vsub.f32 %v21, %v33
    %v35 = vmul.f32 %v34, 1.442695
    %v36 = vpow.pop %v35
    %v37 = vsel %vm30, %v36, 0.0
    %38 = vadd.xlane.f32.xlu0 %v37
    %v39 = vpop.xlane.xlu0 %38
    %v40 = vlog2.pop %v39
    %v41 = vmul.f32 %v40, 0.6931472
    %v42 = vadd.f32 %v33, %v41
    %v43 = vsel %vm29, %v21, 0.0
    %v44 = vsel %vm30, %v43, 0.0
    %45 = vadd.xlane.f32.xlu0 %v44
    %v46 = vpop.xlane.xlu0 %45
    %v48 = vlaneseq
    %v49 = vshrl.u32 %v48, 7
    %v50 = vsub.s32 0, %v49
    %v51 = vrot.slane %v23, %v50
    %v53 = vsel %vm29, %v51, 0.0
    %v54 = vsel %vm30, %v53, 0.0
    %55 = vadd.xlane.f32.xlu0 %v54
    %v56 = vpop.xlane.xlu0 %55
    %v57 = vsub.f32 %v42, %v46
    %v58 = vsub.f32 0.0, %v57
    %v59 = vmul.f32 %v58, 1.442695
    %v60 = vpow.pop %v59
    %v61 = vsub.f32 1.0, %v60
    %v62 = vmax.f32 %v61, 0.0
    %v63 = vmul.f32 %v62, %v62
    %v64 = vmul.f32 %v56, %v63
    %v65 = vmul.f32 %v64, %v57
    %s66 = smul.u32 0, 8
    %v67 = vlaneseq
    %v68 = vshrl.u32 %v67, 7
    %v69 = vstv %s66
    %v70 = vadd.s32 %v69, %v68
    %vm71 = vcmp.lt.s32.totalorder %v70, 8
    %v72 = vsel %vm71, %v65, 0.0
    %v73 = vld [vmem:[#allocation2] sm:$0x1]
    %v74 = vrot.slane %v72, 4
    %v75 = vadd.f32 %v72, %v74
    %v76 = vrot.slane %v75, 2
    %v77 = vadd.f32 %v75, %v76
    %v78 = vrot.slane %v77, 1
    %v79 = vadd.f32 %v77, %v78
    %v80 = vadd.f32 %v73, %v79
    %vm81 = vcmask 0
    %82 = vst.msk [vmem:[#allocation2] sm:$0x1] %vm81, %v80
    // Predicated region
    $region18: #{tpu_custom_call.1} parent=1 // pred_check
      %p83 = pneg %p15
    $region19: #{tpu_custom_call.1} parent=1 // pred_check_branch
      %85 = sbr.rel (%p83) target = $region21
    $region20: #{tpu_custom_call.1} parent=1 // pred_region
      %v86 = vld [vmem:[#allocation2] sm:$0x1]
      %v87 = vrcp.pop 8.0
      %v88 = vmul.f32 %v86, %v87
      %89 = vst.msk [vmem:[#allocation2] sm:$0x1] %vm81, %v88
    $region21: #{tpu_custom_call.1} parent=1 // pred_fallthru
      _
    // Predicated region
    $region22: #{tpu_custom_call.1} parent=1 // pred_check
      _
    $region23: #{tpu_custom_call.1} parent=1 // pred_check_branch
      %91 = sbr.rel (0) target = $region25
    $region24: #{tpu_custom_call.1} parent=1 // pred_region
      %s93 = ssub.s32 16, 16
      %94 = vsyncadd [#allocation3], %s93
      %s96 = sshll.u32 [#allocation2], 4
      %s97 = int_to_ptr.vmem [resolvable:$true] %s96
      %99 = dma.vmem_to_hbm [thread:$0]  %s97, 16, %s3, [#allocation3]
    $region25: #{tpu_custom_call.1} parent=1 // pred_fallthru
      _
    // Predicated region
    $region26: #{tpu_custom_call.1} parent=1 // pred_check
      _
    $region27: #{tpu_custom_call.1} parent=1 // pred_check_branch
      %101 = sbr.rel (0) target = $region29
    $region28: #{tpu_custom_call.1} parent=1 // pred_region
      %102 = dma.done [#allocation3], 16
    $region29: #{tpu_custom_call.1} parent=1 // pred_fallthru
      _
    %103 = vsyncpa [#allocation3], 1

</llo_original>
